<compile_context>
chip_gen: v7x
topology: tpu7x:2x2x1
jax: 0.10.0
libtpu: 0.0.40
codegen_flags: <defaults>
</compile_context>

<pallas_src>
import numpy as np
import jax
import jax.numpy as jnp
from jax.experimental import pallas as pl
from jax.experimental.pallas import tpu as pltpu


def _round_up(x, m):
    return -(-x // m) * m


def _pick_tile(dim, cap, align):
    """Largest multiple of `align` <= cap that divides round_up(dim, align).

    Guarantees the padded extent equals round_up(dim, align), so arrays whose dims
    are already `align`-multiples (the common case) never need a jnp.pad copy.
    """
    aligned = _round_up(dim, align)
    if aligned <= cap:
        return aligned
    t = (cap // align) * align
    while t > align:
        if aligned % t == 0:
            return t
        t -= align
    return align


# ----------------------------------------------------------------------------
# Pallas kernel 1: tiled matmul  C = A @ B  or  C = A @ B^T
#   - operands cast to bf16 in VMEM (full MXU rate, no extra HBM cast pass)
#   - f32 accumulation in a VMEM scratch, written back on the last K step
# ----------------------------------------------------------------------------
def _make_matmul_kernel(transpose_rhs):
    dn = (((1,), (1,)), ((), ())) if transpose_rhs else (((1,), (0,)), ((), ()))

    def kernel(a_ref, b_ref, o_ref, acc_ref):
        @pl.when(pl.program_id(2) == 0)
        def _():
            acc_ref[...] = jnp.zeros_like(acc_ref)

        a = a_ref[...].astype(jnp.bfloat16)     # in-VMEM cast: no HBM cast copy
        b = b_ref[...].astype(jnp.bfloat16)
        acc_ref[...] += jax.lax.dot_general(
            a, b, dimension_numbers=dn, preferred_element_type=jnp.float32)

        @pl.when(pl.program_id(2) == pl.num_programs(2) - 1)
        def _():
            o_ref[...] = acc_ref[...].astype(o_ref.dtype)

    return kernel


def pallas_matmul(a, b, *, transpose_rhs=False, tm_cap=256, tn_cap=512,
                  tk_cap=1024, out_dtype=jnp.float32):
    """A @ B (transpose_rhs=False, B:(K,N)) or A @ B^T (transpose_rhs=True, B:(N,K)).

    Operands keep their HBM dtype and are cast to bf16 inside the kernel (f32 MXU
    accumulation).  Tile sizes are clamped to the 128-aligned problem so small dims
    don't waste VMEM and aligned dims need no padding; truly ragged dims fall back
    to zero padding (sliced off the output).  Worst-case VMEM footprint with f32
    inputs and the default caps is ~7.5 MiB (fits the v5e/v6e/v7x scoped defaults).
    """
    M, K = a.shape
    if transpose_rhs:
        N, Kb = b.shape
    else:
        Kb, N = b.shape
    assert K == Kb, (a.shape, b.shape, transpose_rhs)

    sub_a = 8 * (4 // jnp.dtype(a.dtype).itemsize)   # 8 rows (f32) / 16 rows (bf16)
    tm = _pick_tile(M, tm_cap, sub_a)
    tn = _pick_tile(N, tn_cap, 128)
    tk = _pick_tile(K, tk_cap, 128)
    Mp, Np, Kp = _round_up(M, tm), _round_up(N, tn), _round_up(K, tk)

    if (Mp, Kp) != (M, K):
        a = jnp.pad(a, ((0, Mp - M), (0, Kp - K)))
    if transpose_rhs:
        if (Np, Kp) != (N, K):
            b = jnp.pad(b, ((0, Np - N), (0, Kp - K)))
        b_spec = pl.BlockSpec((tn, tk), lambda i, j, k: (j, k))
    else:
        if (Kp, Np) != (K, N):
            b = jnp.pad(b, ((0, Kp - K), (0, Np - N)))
        b_spec = pl.BlockSpec((tk, tn), lambda i, j, k: (k, j))

    grid = (Mp // tm, Np // tn, Kp // tk)
    out = pl.pallas_call(
        _make_matmul_kernel(transpose_rhs),
        out_shape=jax.ShapeDtypeStruct((Mp, Np), out_dtype),
        grid_spec=pltpu.PrefetchScalarGridSpec(
            num_scalar_prefetch=0,
            grid=grid,
            in_specs=[pl.BlockSpec((tm, tk), lambda i, j, k: (i, k)), b_spec],
            out_specs=pl.BlockSpec((tm, tn), lambda i, j, k: (i, j)),
            scratch_shapes=[pltpu.VMEM((tm, tn), jnp.float32)],
        ),
        compiler_params=pltpu.CompilerParams(
            dimension_semantics=("parallel", "parallel", "arbitrary")),
    )(a, b)
    if (Mp, Np) != (M, N):
        out = out[:M, :N]
    return out


# ----------------------------------------------------------------------------
# Pallas kernel 2: build M^T = Vh^T . H_r(rev) . diag(s) . H_l(rev)   (D, K)
# Row reflections, same math as PyTorch `householder` (vectors pre-normalized).
# Tiled over D (rows are independent), vectors/scale broadcast to every tile.
# ----------------------------------------------------------------------------
def _reflect_chain_kernel(a_ref, pre_ref, s_ref, post_ref, o_ref):
    w = a_ref[...].astype(jnp.float32)              # (td, K)
    for i in range(pre_ref.shape[0]):                # static unroll (few vectors)
        v = pre_ref[i:i + 1, :]                      # (1, K)
        w = w - 2.0 * jnp.sum(w * v, axis=-1, keepdims=True) * v
    w = w * s_ref[...]                               # (1, K) broadcast: diag(s)
    for i in range(post_ref.shape[0]):
        v = post_ref[i:i + 1, :]
        w = w - 2.0 * jnp.sum(w * v, axis=-1, keepdims=True) * v
    o_ref[...] = w


def pallas_reflect_chain(a, pre_vecs, s_row, post_vecs, *, td_cap=512):
    Dm, K = a.shape
    P, Q = pre_vecs.shape[0], post_vecs.shape[0]
    td = _pick_tile(Dm, td_cap, 8)
    Dp = _round_up(Dm, td)
    if Dp != Dm:
        a = jnp.pad(a, ((0, Dp - Dm), (0, 0)))
    out = pl.pallas_call(
        _reflect_chain_kernel,
        out_shape=jax.ShapeDtypeStruct((Dp, K), jnp.float32),
        grid_spec=pltpu.PrefetchScalarGridSpec(
            num_scalar_prefetch=0,
            grid=(Dp // td,),
            in_specs=[pl.BlockSpec((td, K), lambda i: (i, 0)),
                      pl.BlockSpec((P, K), lambda i: (0, 0)),
                      pl.BlockSpec((1, K), lambda i: (0, 0)),
                      pl.BlockSpec((Q, K), lambda i: (0, 0))],
            out_specs=pl.BlockSpec((td, K), lambda i: (i, 0)),
        ),
        compiler_params=pltpu.CompilerParams(
            dimension_semantics=("parallel",)),
    )(a, pre_vecs, s_row, post_vecs)
    if Dp != Dm:
        out = out[:Dm]
    return out


# ----------------------------------------------------------------------------
# Glue: normalization + collapsed TiedLinear forward
# ----------------------------------------------------------------------------
def _l2_normalize(v, eps=1e-12):
    n = jnp.sqrt(jnp.sum(v * v, axis=-1, keepdims=True))
    return v / jnp.maximum(n, eps)


def _prep_vecs(vecs, K):
    # Empty ParameterList -> one zero row: normalized zero vector => identity reflection.
    if vecs.shape[0] == 0:
        return jnp.zeros((1, K), jnp.float32)
    return _l2_normalize(vecs.astype(jnp.float32))


@jax.jit
def tied_linear_forward(x, u, s, vh, left_params, right_params):
    """x: (B, S, D) -> logits (B, S, V), matching F.linear(x, W_reconstructed)."""
    B, S, D = x.shape
    V, K = u.shape
    left_n = _prep_vecs(left_params, K)              # (L, K)
    right_n = _prep_vecs(right_params, K)            # (R, K)

    # M^T = Vh^T . H_{r,R-1}..H_{r,0} . diag(s) . H_{l,L-1}..H_{l,0}   (D, K)
    mt = pallas_reflect_chain(
        jnp.transpose(vh).astype(jnp.float32),       # tiny (D, K) transpose
        right_n[::-1],
        s.astype(jnp.float32)[None, :],
        left_n[::-1])

    # out = (x @ M^T) @ U^T  -- never materializes W (V, D) or W_house (V, K).
    x_flat = x.reshape(B * S, D)
    h = pallas_matmul(x_flat, mt, transpose_rhs=False,
                      out_dtype=jnp.bfloat16)        # (B*S, K)
    out = pallas_matmul(h, u, transpose_rhs=True,
                        out_dtype=jnp.float32)       # (B*S, V); NT: no u.T in HBM
    return out.reshape(B, S, V)


def reference_forward(x, u, s, vh, left_params, right_params):
    """Pure-JAX f32 reference mirroring the PyTorch computation order."""
    def hh(m, v):
        v = _l2_normalize(v)
        return m - 2.0 * jnp.sum(m * v, axis=-1, keepdims=True) * v
    w = u
    for i in range(left_params.shape[0]):
        w = hh(w, left_params[i])
    w = w * s
    for i in range(right_params.shape[0]):
        w = hh(w, right_params[i])
    weight = w @ vh                                   # (V, D)
    return jnp.einsum("bsd,vd->bsv", x, weight)


if __name__ == "__main__":
    # Small, module-consistent shapes.
    V, D = 256, 128            # num_embeddings, embedding_dim
    K = min(V, D)              # SVD rank
    B, S = 2, 8                # batch, sequence
    N_LEFT, N_RIGHT = 2, 1     # sizes of the left/right ParameterLists

    key = jax.random.PRNGKey(0)
    k_emb, k_x, k_l, k_r = jax.random.split(key, 4)

    # Deterministic "embedding.weight" and SVD buffers (u, z/s, v) from __init__.
    # (The SVD itself is one-time module init, done on host — not a kernel.)
    emb_weight = np.asarray(jax.random.normal(k_emb, (V, D), jnp.float32))
    u_np, s_np, vh_np = np.linalg.svd(emb_weight.astype(np.float64),
                                      full_matrices=False)
    u = jnp.asarray(u_np, jnp.float32)               # (V, K)
    s = jnp.asarray(s_np, jnp.float32)               # (K,)  sigma parameter
    vh = jnp.asarray(vh_np, jnp.float32)             # (K, D)

    # Householder parameter vectors (shape like s, i.e. (K,)).
    left_params = jax.random.normal(k_l, (N_LEFT, K), jnp.float32)
    right_params = jax.random.normal(k_r, (N_RIGHT, K), jnp.float32)

    # Input to TiedLinear: hidden states (B, S, D).
    x = jax.random.normal(k_x, (B, S, D), jnp.float32)

    out = tied_linear_forward(x, u, s, vh, left_params, right_params)
    out = jax.block_until_ready(out)

    ref = np.asarray(reference_forward(x, u, s, vh, left_params, right_params))
    assert out.shape == (B, S, V), out.shape
    # bf16 matmul operands (f32 accumulation): scale-aware tolerance.
    atol = 2e-2 * float(np.max(np.abs(ref)))
    np.testing.assert_allclose(np.asarray(out), ref, rtol=2e-2, atol=atol)
    print("KERNEL_OK")
</pallas_src>

<mosaic_0001>
module attributes {stable_mosaic.version = 11 : i64} {
  func.func @_reflect_chain_kernel(%arg0: i32, %arg1: memref<128x128xf32, #tpu.memory_space<vmem>>, %arg2: memref<1x128xf32, #tpu.memory_space<vmem>>, %arg3: memref<1x128xf32, #tpu.memory_space<vmem>>, %arg4: memref<2x128xf32, #tpu.memory_space<vmem>>, %arg5: memref<128x128xf32, #tpu.memory_space<vmem>>) attributes {dimension_semantics = [#tpu.dimension_semantics<parallel>], iteration_bounds = array<i64: 1>, scalar_prefetch = 0 : i64, scratch_operands = 0 : i64, tpu.core_type = #tpu.core_type<tc>, window_params = [{transform_indices = @transform_0, window_bounds = array<i64: 128, 128>}, {pipeline_mode = #tpu.pipeline_mode<synchronous>, transform_indices = @transform_1, window_bounds = array<i64: 1, 128>}, {pipeline_mode = #tpu.pipeline_mode<synchronous>, transform_indices = @transform_2, window_bounds = array<i64: 1, 128>}, {pipeline_mode = #tpu.pipeline_mode<synchronous>, transform_indices = @transform_3, window_bounds = array<i64: 2, 128>}, {transform_indices = @transform_4, window_bounds = array<i64: 128, 128>}]} {
    %c0 = arith.constant 0 : index
    %c0_0 = arith.constant 0 : index
    %0 = vector.load %arg1[%c0, %c0_0] : memref<128x128xf32, #tpu.memory_space<vmem>>, vector<128x128xf32>
    %c0_1 = arith.constant 0 : index
    %c0_2 = arith.constant 0 : index
    %1 = vector.load %arg2[%c0_1, %c0_2] : memref<1x128xf32, #tpu.memory_space<vmem>>, vector<1x128xf32>
    %2 = vector.broadcast %1 : vector<1x128xf32> to vector<128x128xf32>
    %3 = arith.mulf %0, %2 : vector<128x128xf32>
    %cst = arith.constant dense<0.000000e+00> : vector<128xf32>
    %4 = vector.multi_reduction <add>, %3, %cst [1] : vector<128x128xf32> to vector<128xf32>
    %5 = vector.shape_cast %4 : vector<128xf32> to vector<128x1xf32>
    %cst_3 = arith.constant 2.000000e+00 : f32
    %6 = vector.broadcast %cst_3 : f32 to vector<128x1xf32>
    %7 = arith.mulf %6, %5 : vector<128x1xf32>
    %8 = vector.broadcast %7 : vector<128x1xf32> to vector<128x128xf32>
    %9 = vector.broadcast %1 : vector<1x128xf32> to vector<128x128xf32>
    %10 = arith.mulf %8, %9 : vector<128x128xf32>
    %11 = arith.subf %0, %10 : vector<128x128xf32>
    %c0_4 = arith.constant 0 : index
    %c0_5 = arith.constant 0 : index
    %12 = vector.load %arg3[%c0_4, %c0_5] : memref<1x128xf32, #tpu.memory_space<vmem>>, vector<1x128xf32>
    %13 = vector.broadcast %12 : vector<1x128xf32> to vector<128x128xf32>
    %14 = arith.mulf %11, %13 : vector<128x128xf32>
    %c0_6 = arith.constant 0 : index
    %c0_7 = arith.constant 0 : index
    %15 = vector.load %arg4[%c0_6, %c0_7] : memref<2x128xf32, #tpu.memory_space<vmem>>, vector<1x128xf32>
    %16 = vector.broadcast %15 : vector<1x128xf32> to vector<128x128xf32>
    %17 = arith.mulf %14, %16 : vector<128x128xf32>
    %cst_8 = arith.constant dense<0.000000e+00> : vector<128xf32>
    %18 = vector.multi_reduction <add>, %17, %cst_8 [1] : vector<128x128xf32> to vector<128xf32>
    %19 = vector.shape_cast %18 : vector<128xf32> to vector<128x1xf32>
    %cst_9 = arith.constant 2.000000e+00 : f32
    %20 = vector.broadcast %cst_9 : f32 to vector<128x1xf32>
    %21 = arith.mulf %20, %19 : vector<128x1xf32>
    %22 = vector.broadcast %21 : vector<128x1xf32> to vector<128x128xf32>
    %23 = vector.broadcast %15 : vector<1x128xf32> to vector<128x128xf32>
    %24 = arith.mulf %22, %23 : vector<128x128xf32>
    %25 = arith.subf %14, %24 : vector<128x128xf32>
    %c1 = arith.constant 1 : index
    %c0_10 = arith.constant 0 : index
    %26 = vector.load %arg4[%c1, %c0_10] : memref<2x128xf32, #tpu.memory_space<vmem>>, vector<1x128xf32>
    %27 = vector.broadcast %26 : vector<1x128xf32> to vector<128x128xf32>
    %28 = arith.mulf %25, %27 : vector<128x128xf32>
    %cst_11 = arith.constant dense<0.000000e+00> : vector<128xf32>
    %29 = vector.multi_reduction <add>, %28, %cst_11 [1] : vector<128x128xf32> to vector<128xf32>
    %30 = vector.shape_cast %29 : vector<128xf32> to vector<128x1xf32>
    %cst_12 = arith.constant 2.000000e+00 : f32
    %31 = vector.broadcast %cst_12 : f32 to vector<128x1xf32>
    %32 = arith.mulf %31, %30 : vector<128x1xf32>
    %33 = vector.broadcast %32 : vector<128x1xf32> to vector<128x128xf32>
    %34 = vector.broadcast %26 : vector<1x128xf32> to vector<128x128xf32>
    %35 = arith.mulf %33, %34 : vector<128x128xf32>
    %36 = arith.subf %25, %35 : vector<128x128xf32>
    %c0_13 = arith.constant 0 : index
    %c0_14 = arith.constant 0 : index
    %37 = vector.load %arg5[%c0_13, %c0_14] : memref<128x128xf32, #tpu.memory_space<vmem>>, vector<128x128xf32>
    tpu.vector_store %arg5[%c0_13, %c0_14], %36 {strides = array<i32>} : memref<128x128xf32, #tpu.memory_space<vmem>>, vector<128x128xf32>,
    return
  }
  func.func @transform_0(%arg0: i32) -> (i32, i32) {
    %c0_i32 = arith.constant 0 : i32
    %c0_i32_0 = arith.constant 0 : i32
    return %arg0, %c0_i32 : i32, i32
  }
  func.func @transform_1(%arg0: i32) -> (i32, i32) {
    %c0_i32 = arith.constant 0 : i32
    %c0_i32_0 = arith.constant 0 : i32
    %c0_i32_1 = arith.constant 0 : i32
    return %c0_i32, %c0_i32_0 : i32, i32
  }
  func.func @transform_2(%arg0: i32) -> (i32, i32) {
    %c0_i32 = arith.constant 0 : i32
    %c0_i32_0 = arith.constant 0 : i32
    %c0_i32_1 = arith.constant 0 : i32
    return %c0_i32, %c0_i32_0 : i32, i32
  }
  func.func @transform_3(%arg0: i32) -> (i32, i32) {
    %c0_i32 = arith.constant 0 : i32
    %c0_i32_0 = arith.constant 0 : i32
    %c0_i32_1 = arith.constant 0 : i32
    return %c0_i32, %c0_i32_0 : i32, i32
  }
  func.func @transform_4(%arg0: i32) -> (i32, i32) {
    %c0_i32 = arith.constant 0 : i32
    %c0_i32_0 = arith.constant 0 : i32
    return %arg0, %c0_i32 : i32, i32
  }
}

module attributes {stable_mosaic.version = 11 : i64} {
  func.func @kernel(%arg0: i32, %arg1: i32, %arg2: i32, %arg3: memref<16x128xf32, #tpu.memory_space<vmem>>, %arg4: memref<128x128xf32, #tpu.memory_space<vmem>>, %arg5: memref<16x128xbf16, #tpu.memory_space<vmem>>, %arg6: memref<16x128xf32, #tpu.memory_space<vmem>>) attributes {dimension_semantics = [#tpu.dimension_semantics<parallel>, #tpu.dimension_semantics<parallel>, #tpu.dimension_semantics<arbitrary>], iteration_bounds = array<i64: 1, 1, 1>, scalar_prefetch = 0 : i64, scratch_operands = 1 : i64, tpu.core_type = #tpu.core_type<tc>, window_params = [{transform_indices = @transform_0, window_bounds = array<i64: 16, 128>}, {transform_indices = @transform_1, window_bounds = array<i64: 128, 128>}, {transform_indices = @transform_2, window_bounds = array<i64: 16, 128>}]} {
    %c0_i32 = arith.constant 0 : i32
    %0 = arith.cmpi eq, %arg2, %c0_i32 : i32
    %1 = arith.extui %0 : i1 to i32
    %c0_i32_0 = arith.constant 0 : i32
    %2 = arith.cmpi ne, %1, %c0_i32_0 : i32
    scf.if %2 {
      %cst_10 = arith.constant 0.000000e+00 : f32
      %14 = vector.broadcast %cst_10 : f32 to vector<16x128xf32>
      %c0_11 = arith.constant 0 : index
      %c0_12 = arith.constant 0 : index
      %15 = vector.load %arg6[%c0_11, %c0_12] : memref<16x128xf32, #tpu.memory_space<vmem>>, vector<16x128xf32>
      tpu.vector_store %arg6[%c0_11, %c0_12], %14 {strides = array<i32>} : memref<16x128xf32, #tpu.memory_space<vmem>>, vector<16x128xf32>,
    } else {
    }
    %c0 = arith.constant 0 : index
    %c0_1 = arith.constant 0 : index
    %3 = vector.load %arg3[%c0, %c0_1] : memref<16x128xf32, #tpu.memory_space<vmem>>, vector<16x128xf32>
    %4 = arith.truncf %3 : vector<16x128xf32> to vector<16x128xbf16>
    %c0_2 = arith.constant 0 : index
    %c0_3 = arith.constant 0 : index
    %5 = vector.load %arg4[%c0_2, %c0_3] : memref<128x128xf32, #tpu.memory_space<vmem>>, vector<128x128xf32>
    %6 = arith.truncf %5 : vector<128x128xf32> to vector<128x128xbf16>
    %c0_4 = arith.constant 0 : index
    %c0_5 = arith.constant 0 : index
    %7 = vector.load %arg6[%c0_4, %c0_5] : memref<16x128xf32, #tpu.memory_space<vmem>>, vector<16x128xf32>
    %cst = arith.constant dense<0.000000e+00> : vector<16x128xf32>
    %8 = tpu.matmul %4, %6, %cst {dimension_numbers = #tpu.dot_dimension_numbers<[1], [0], [0], [1], [0, 0, 1, 1], [], []>} : vector<16x128xbf16>, vector<128x128xbf16>, vector<16x128xf32> -> vector<16x128xf32>
    %9 = arith.addf %7, %8 : vector<16x128xf32>
    %c0_6 = arith.constant 0 : index
    %c0_7 = arith.constant 0 : index
    %10 = vector.load %arg6[%c0_6, %c0_7] : memref<16x128xf32, #tpu.memory_space<vmem>>, vector<16x128xf32>
    tpu.vector_store %arg6[%c0_6, %c0_7], %9 {strides = array<i32>} : memref<16x128xf32, #tpu.memory_space<vmem>>, vector<16x128xf32>,
    %c0_i32_8 = arith.constant 0 : i32
    %11 = arith.cmpi eq, %arg2, %c0_i32_8 : i32
    %12 = arith.extui %11 : i1 to i32
    %c0_i32_9 = arith.constant 0 : i32
    %13 = arith.cmpi ne, %12, %c0_i32_9 : i32
    scf.if %13 {
      %c0_10 = arith.constant 0 : index
      %c0_11 = arith.constant 0 : index
      %14 = vector.load %arg6[%c0_10, %c0_11] : memref<16x128xf32, #tpu.memory_space<vmem>>, vector<16x128xf32>
      %15 = arith.truncf %14 : vector<16x128xf32> to vector<16x128xbf16>
      %c0_12 = arith.constant 0 : index
      %c0_13 = arith.constant 0 : index
      %16 = vector.load %arg5[%c0_12, %c0_13] : memref<16x128xbf16, #tpu.memory_space<vmem>>, vector<16x128xbf16>
      tpu.vector_store %arg5[%c0_12, %c0_13], %15 {strides = array<i32>} : memref<16x128xbf16, #tpu.memory_space<vmem>>, vector<16x128xbf16>,
    } else {
    }
    return
  }
  func.func @transform_0(%arg0: i32, %arg1: i32, %arg2: i32) -> (i32, i32) {
    %c0_i32 = arith.constant 0 : i32
    return %arg0, %arg2 : i32, i32
  }
  func.func @transform_1(%arg0: i32, %arg1: i32, %arg2: i32) -> (i32, i32) {
    %c0_i32 = arith.constant 0 : i32
    return %arg2, %arg1 : i32, i32
  }
  func.func @transform_2(%arg0: i32, %arg1: i32, %arg2: i32) -> (i32, i32) {
    %c0_i32 = arith.constant 0 : i32
    return %arg0, %arg1 : i32, i32
  }
}

module attributes {stable_mosaic.version = 11 : i64} {
  func.func @kernel(%arg0: i32, %arg1: i32, %arg2: i32, %arg3: memref<16x128xbf16, #tpu.memory_space<vmem>>, %arg4: memref<256x128xf32, #tpu.memory_space<vmem>>, %arg5: memref<16x256xf32, #tpu.memory_space<vmem>>, %arg6: memref<16x256xf32, #tpu.memory_space<vmem>>) attributes {dimension_semantics = [#tpu.dimension_semantics<parallel>, #tpu.dimension_semantics<parallel>, #tpu.dimension_semantics<arbitrary>], iteration_bounds = array<i64: 1, 1, 1>, scalar_prefetch = 0 : i64, scratch_operands = 1 : i64, tpu.core_type = #tpu.core_type<tc>, window_params = [{transform_indices = @transform_0, window_bounds = array<i64: 16, 128>}, {transform_indices = @transform_1, window_bounds = array<i64: 256, 128>}, {transform_indices = @transform_2, window_bounds = array<i64: 16, 256>}]} {
    %c0_i32 = arith.constant 0 : i32
    %0 = arith.cmpi eq, %arg2, %c0_i32 : i32
    %1 = arith.extui %0 : i1 to i32
    %c0_i32_0 = arith.constant 0 : i32
    %2 = arith.cmpi ne, %1, %c0_i32_0 : i32
    scf.if %2 {
      %cst_10 = arith.constant 0.000000e+00 : f32
      %13 = vector.broadcast %cst_10 : f32 to vector<16x256xf32>
      %c0_11 = arith.constant 0 : index
      %c0_12 = arith.constant 0 : index
      %14 = vector.load %arg6[%c0_11, %c0_12] : memref<16x256xf32, #tpu.memory_space<vmem>>, vector<16x256xf32>
      tpu.vector_store %arg6[%c0_11, %c0_12], %13 {strides = array<i32>} : memref<16x256xf32, #tpu.memory_space<vmem>>, vector<16x256xf32>,
    } else {
    }
    %c0 = arith.constant 0 : index
    %c0_1 = arith.constant 0 : index
    %3 = vector.load %arg3[%c0, %c0_1] : memref<16x128xbf16, #tpu.memory_space<vmem>>, vector<16x128xbf16>
    %c0_2 = arith.constant 0 : index
    %c0_3 = arith.constant 0 : index
    %4 = vector.load %arg4[%c0_2, %c0_3] : memref<256x128xf32, #tpu.memory_space<vmem>>, vector<256x128xf32>
    %5 = arith.truncf %4 : vector<256x128xf32> to vector<256x128xbf16>
    %c0_4 = arith.constant 0 : index
    %c0_5 = arith.constant 0 : index
    %6 = vector.load %arg6[%c0_4, %c0_5] : memref<16x256xf32, #tpu.memory_space<vmem>>, vector<16x256xf32>
    %cst = arith.constant dense<0.000000e+00> : vector<16x256xf32>
    %7 = tpu.matmul %3, %5, %cst {dimension_numbers = #tpu.dot_dimension_numbers<[1], [1], [0], [0], [0, 0, 1, 0], [], []>} : vector<16x128xbf16>, vector<256x128xbf16>, vector<16x256xf32> -> vector<16x256xf32>
    %8 = arith.addf %6, %7 : vector<16x256xf32>
    %c0_6 = arith.constant 0 : index
    %c0_7 = arith.constant 0 : index
    %9 = vector.load %arg6[%c0_6, %c0_7] : memref<16x256xf32, #tpu.memory_space<vmem>>, vector<16x256xf32>
    tpu.vector_store %arg6[%c0_6, %c0_7], %8 {strides = array<i32>} : memref<16x256xf32, #tpu.memory_space<vmem>>, vector<16x256xf32>,
    %c0_i32_8 = arith.constant 0 : i32
    %10 = arith.cmpi eq, %arg2, %c0_i32_8 : i32
    %11 = arith.extui %10 : i1 to i32
    %c0_i32_9 = arith.constant 0 : i32
    %12 = arith.cmpi ne, %11, %c0_i32_9 : i32
    scf.if %12 {
      %c0_10 = arith.constant 0 : index
      %c0_11 = arith.constant 0 : index
      %13 = vector.load %arg6[%c0_10, %c0_11] : memref<16x256xf32, #tpu.memory_space<vmem>>, vector<16x256xf32>
      %c0_12 = arith.constant 0 : index
      %c0_13 = arith.constant 0 : index
      %14 = vector.load %arg5[%c0_12, %c0_13] : memref<16x256xf32, #tpu.memory_space<vmem>>, vector<16x256xf32>
      tpu.vector_store %arg5[%c0_12, %c0_13], %13 {strides = array<i32>} : memref<16x256xf32, #tpu.memory_space<vmem>>, vector<16x256xf32>,
    } else {
    }
    return
  }
  func.func @transform_0(%arg0: i32, %arg1: i32, %arg2: i32) -> (i32, i32) {
    %c0_i32 = arith.constant 0 : i32
    return %arg0, %arg2 : i32, i32
  }
  func.func @transform_1(%arg0: i32, %arg1: i32, %arg2: i32) -> (i32, i32) {
    %c0_i32 = arith.constant 0 : i32
    return %arg1, %arg2 : i32, i32
  }
  func.func @transform_2(%arg0: i32, %arg1: i32, %arg2: i32) -> (i32, i32) {
    %c0_i32 = arith.constant 0 : i32
    return %arg0, %arg1 : i32, i32
  }
}

</mosaic_0001>

<llo_original>
// kernel: tied_linear_forward.3
$region0: #{tied_linear_forward.3}
  #allocation0 [shape = 'u32[]', space=smem, size = 0x4, offset = 0x4, fixed_abs, tag = 'smem constant byte address 0x4 - core index']
  #allocation1 [shape = 'u32[144,128]{1,0:T(1,128)}', space=vmem, size = 0x12000, scoped, tag = 'internal scratch']
  %s0 = inlined_call_operand.vmem [shape: f32[128,128], index: 0, kind: input, shape index: {}]
  %s1 = inlined_call_operand.vmem [shape: f32[1,128], index: 1, kind: input, shape index: {}]
  %s2 = inlined_call_operand.vmem [shape: f32[1,128], index: 2, kind: input, shape index: {}]
  %s3 = inlined_call_operand.vmem [shape: f32[2,128], index: 3, kind: input, shape index: {}]
  %s4 = inlined_call_operand.vmem [shape: f32[128,128], index: 4, kind: output, shape index: {}]
  %s5 = sld [smem:[#allocation0]]
  $region26: #{tied_linear_forward.3} parent=0
    _
  %s7 = ssub.s32 1, %s5
  %s8 = scalar_select 0, %s7, %s5
  // Predicated region
  $region2: #{tied_linear_forward.3} parent=0 // pred_check
    _
  $region3: #{tied_linear_forward.3} parent=0 // pred_check_branch
    %10 = sbr.rel (0) target = $region5
  $region4: #{tied_linear_forward.3} parent=0 // pred_region
    _
  $region5: #{tied_linear_forward.3} parent=0 // pred_fallthru
    _
  // Predicated region
  $region6: #{tied_linear_forward.3} parent=0 // pred_check
    _
  $region7: #{tied_linear_forward.3} parent=0 // pred_check_branch
    %12 = sbr.rel (0) target = $region9
  $region8: #{tied_linear_forward.3} parent=0 // pred_region
    _
  $region9: #{tied_linear_forward.3} parent=0 // pred_fallthru
    _
  // Predicated region
  $region10: #{tied_linear_forward.3} parent=0 // pred_check
    _
  $region11: #{tied_linear_forward.3} parent=0 // pred_check_branch
    %14 = sbr.rel (0) target = $region13
  $region12: #{tied_linear_forward.3} parent=0 // pred_region
    _
  $region13: #{tied_linear_forward.3} parent=0 // pred_fallthru
    _
  // Predicated region
  $region14: #{tied_linear_forward.3} parent=0 // pred_check
    _
  $region15: #{tied_linear_forward.3} parent=0 // pred_check_branch
    %16 = sbr.rel (0) target = $region17
  $region16: #{tied_linear_forward.3} parent=0 // pred_region
    _
  $region17: #{tied_linear_forward.3} parent=0 // pred_fallthru
    _
  %v17 = vld [vmem:[%s0] sm:$0xff]
  %v18 = vld [vmem:[%s0 + $0x8] sm:$0xff]
  %v19 = vld [vmem:[%s0 + $0x10] sm:$0xff]
  %v20 = vld [vmem:[%s0 + $0x18] sm:$0xff]
  %v21 = vld [vmem:[%s0 + $0x20] sm:$0xff]
  %v22 = vld [vmem:[%s0 + $0x28] sm:$0xff]
  %v23 = vld [vmem:[%s0 + $0x30] sm:$0xff]
  %v24 = vld [vmem:[%s0 + $0x38] sm:$0xff]
  %v25 = vld [vmem:[%s0 + $0x40] sm:$0xff]
  %v26 = vld [vmem:[%s0 + $0x48] sm:$0xff]
  %v27 = vld [vmem:[%s0 + $0x50] sm:$0xff]
  %v28 = vld [vmem:[%s0 + $0x58] sm:$0xff]
  %v29 = vld [vmem:[%s0 + $0x60] sm:$0xff]
  %v30 = vld [vmem:[%s0 + $0x68] sm:$0xff]
  %v31 = vld [vmem:[%s0 + $0x70] sm:$0xff]
  %v32 = vld [vmem:[%s0 + $0x78] sm:$0xff]
  %v33 = vld [vmem:[%s1] sm:$0x1]
  %v35 = vlaneseq
  %v36 = vshrl.u32 %v35, 7
  %v37 = vsub.s32 0, %v36
  %v38 = vrot.slane %v33, %v37
  %v40 = vmul.f32 %v17, %v38
  %v41 = vmul.f32 %v18, %v38
  %v42 = vmul.f32 %v19, %v38
  %v43 = vmul.f32 %v20, %v38
  %v44 = vmul.f32 %v21, %v38
  %v45 = vmul.f32 %v22, %v38
  %v46 = vmul.f32 %v23, %v38
  %v47 = vmul.f32 %v24, %v38
  %v48 = vmul.f32 %v25, %v38
  %v49 = vmul.f32 %v26, %v38
  %v50 = vmul.f32 %v27, %v38
  %v51 = vmul.f32 %v28, %v38
  %v52 = vmul.f32 %v29, %v38
  %v53 = vmul.f32 %v30, %v38
  %v54 = vmul.f32 %v31, %v38
  %v55 = vmul.f32 %v32, %v38
  %56 = vadd.xlane.f32.xlu0 %v40
  %v57 = vpop.xlane.xlu0 %56
  %58 = vadd.xlane.f32.xlu0 %v41
  %v59 = vpop.xlane.xlu0 %58
  %60 = vadd.xlane.f32.xlu0 %v42
  %v61 = vpop.xlane.xlu0 %60
  %62 = vadd.xlane.f32.xlu0 %v43
  %v63 = vpop.xlane.xlu0 %62
  %64 = vadd.xlane.f32.xlu0 %v44
  %v65 = vpop.xlane.xlu0 %64
  %66 = vadd.xlane.f32.xlu0 %v45
  %v67 = vpop.xlane.xlu0 %66
  %68 = vadd.xlane.f32.xlu0 %v46
  %v69 = vpop.xlane.xlu0 %68
  %70 = vadd.xlane.f32.xlu0 %v47
  %v71 = vpop.xlane.xlu0 %70
  %72 = vadd.xlane.f32.xlu0 %v48
  %v73 = vpop.xlane.xlu0 %72
  %74 = vadd.xlane.f32.xlu0 %v49
  %v75 = vpop.xlane.xlu0 %74
  %76 = vadd.xlane.f32.xlu0 %v50
  %v77 = vpop.xlane.xlu0 %76
  %78 = vadd.xlane.f32.xlu0 %v51
  %v79 = vpop.xlane.xlu0 %78
  %80 = vadd.xlane.f32.xlu0 %v52
  %v81 = vpop.xlane.xlu0 %80
  %82 = vadd.xlane.f32.xlu0 %v53
  %v83 = vpop.xlane.xlu0 %82
  %84 = vadd.xlane.f32.xlu0 %v54
  %v85 = vpop.xlane.xlu0 %84
  %86 = vadd.xlane.f32.xlu0 %v55
  %v87 = vpop.xlane.xlu0 %86
  %v88 = vmul.f32 %v57, 2.0
  %v89 = vmul.f32 %v59, 2.0
  %v90 = vmul.f32 %v61, 2.0
  %v91 = vmul.f32 %v63, 2.0
  %v92 = vmul.f32 %v65, 2.0
  %v93 = vmul.f32 %v67, 2.0
  %v94 = vmul.f32 %v69, 2.0
  %v95 = vmul.f32 %v71, 2.0
  %v96 = vmul.f32 %v73, 2.0
  %v97 = vmul.f32 %v75, 2.0
  %v98 = vmul.f32 %v77, 2.0
  %v99 = vmul.f32 %v79, 2.0
  %v100 = vmul.f32 %v81, 2.0
  %v101 = vmul.f32 %v83, 2.0
  %v102 = vmul.f32 %v85, 2.0
  %v103 = vmul.f32 %v87, 2.0
  %v104 = vmul.f32 %v88, %v38
  %v105 = vmul.f32 %v89, %v38
  %v106 = vmul.f32 %v90, %v38
  %v107 = vmul.f32 %v91, %v38
  %v108 = vmul.f32 %v92, %v38
  %v109 = vmul.f32 %v93, %v38
  %v110 = vmul.f32 %v94, %v38
  %v111 = vmul.f32 %v95, %v38
  %v112 = vmul.f32 %v96, %v38
  %v113 = vmul.f32 %v97, %v38
  %v114 = vmul.f32 %v98, %v38
  %v115 = vmul.f32 %v99, %v38
  %v116 = vmul.f32 %v100, %v38
  %v117 = vmul.f32 %v101, %v38
  %v118 = vmul.f32 %v102, %v38
  %v119 = vmul.f32 %v103, %v38
  %v120 = vsub.f32 %v17, %v104
  %v121 = vsub.f32 %v18, %v105
  %v122 = vsub.f32 %v19, %v106
  %v123 = vsub.f32 %v20, %v107
  %v124 = vsub.f32 %v21, %v108
  %v125 = vsub.f32 %v22, %v109
  %v126 = vsub.f32 %v23, %v110
  %v127 = vsub.f32 %v24, %v111
  %v128 = vsub.f32 %v25, %v112
  %v129 = vsub.f32 %v26, %v113
  %v130 = vsub.f32 %v27, %v114
  %v131 = vsub.f32 %v28, %v115
  %v132 = vsub.f32 %v29, %v116
  %v133 = vsub.f32 %v30, %v117
  %v134 = vsub.f32 %v31, %v118
  %v135 = vsub.f32 %v32, %v119
  %v136 = vld [vmem:[%s2] sm:$0x1]
  %v138 = vlaneseq
  %v139 = vshrl.u32 %v138, 7
  %v140 = vsub.s32 0, %v139
  %v141 = vrot.slane %v136, %v140
  %v143 = vmul.f32 %v120, %v141
  %v144 = vmul.f32 %v121, %v141
  %v145 = vmul.f32 %v122, %v141
  %v146 = vmul.f32 %v123, %v141
  %v147 = vmul.f32 %v124, %v141
  %v148 = vmul.f32 %v125, %v141
  %v149 = vmul.f32 %v126, %v141
  %v150 = vmul.f32 %v127, %v141
  %v151 = vmul.f32 %v128, %v141
  %v152 = vmul.f32 %v129, %v141
  %v153 = vmul.f32 %v130, %v141
  %v154 = vmul.f32 %v131, %v141
  %v155 = vmul.f32 %v132, %v141
  %v156 = vmul.f32 %v133, %v141
  %v157 = vmul.f32 %v134, %v141
  %v158 = vmul.f32 %v135, %v141
  %v159 = vld [vmem:[%s3] sm:$0x1]
  %v160 = vlaneseq
  %v161 = vshrl.u32 %v160, 7
  %v162 = vsub.s32 0, %v161
  %v163 = vrot.slane %v159, %v162
  %v164 = vmul.f32 %v143, %v163
  %v165 = vmul.f32 %v144, %v163
  %v166 = vmul.f32 %v145, %v163
  %v167 = vmul.f32 %v146, %v163
  %v168 = vmul.f32 %v147, %v163
  %v169 = vmul.f32 %v148, %v163
  %v170 = vmul.f32 %v149, %v163
  %v171 = vmul.f32 %v150, %v163
  %v172 = vmul.f32 %v151, %v163
  %v173 = vmul.f32 %v152, %v163
  %v174 = vmul.f32 %v153, %v163
  %v175 = vmul.f32 %v154, %v163
  %v176 = vmul.f32 %v155, %v163
  %v177 = vmul.f32 %v156, %v163
  %v178 = vmul.f32 %v157, %v163
  %v179 = vmul.f32 %v158, %v163
  %180 = vadd.xlane.f32.xlu0 %v164
  %v181 = vpop.xlane.xlu0 %180
  %182 = vadd.xlane.f32.xlu0 %v165
  %v183 = vpop.xlane.xlu0 %182
  %184 = vadd.xlane.f32.xlu0 %v166
  %v185 = vpop.xlane.xlu0 %184
  %186 = vadd.xlane.f32.xlu0 %v167
  %v187 = vpop.xlane.xlu0 %186
  %188 = vadd.xlane.f32.xlu0 %v168
  %v189 = vpop.xlane.xlu0 %188
  %190 = vadd.xlane.f32.xlu0 %v169
  %v191 = vpop.xlane.xlu0 %190
  %192 = vadd.xlane.f32.xlu0 %v170
  %v193 = vpop.xlane.xlu0 %192
  %194 = vadd.xlane.f32.xlu0 %v171
  %v195 = vpop.xlane.xlu0 %194
  %196 = vadd.xlane.f32.xlu0 %v172
  %v197 = vpop.xlane.xlu0 %196
  %198 = vadd.xlane.f32.xlu0 %v173
  %v199 = vpop.xlane.xlu0 %198
  %200 = vadd.xlane.f32.xlu0 %v174
  %v201 = vpop.xlane.xlu0 %200
  %202 = vadd.xlane.f32.xlu0 %v175
  %v203 = vpop.xlane.xlu0 %202
  %204 = vadd.xlane.f32.xlu0 %v176
  %v205 = vpop.xlane.xlu0 %204
  %206 = vadd.xlane.f32.xlu0 %v177
  %v207 = vpop.xlane.xlu0 %206
  %208 = vadd.xlane.f32.xlu0 %v178
  %v209 = vpop.xlane.xlu0 %208
  %210 = vadd.xlane.f32.xlu0 %v179
  %v211 = vpop.xlane.xlu0 %210
  %v212 = vmul.f32 %v181, 2.0
  %v213 = vmul.f32 %v183, 2.0
  %v214 = vmul.f32 %v185, 2.0
  %v215 = vmul.f32 %v187, 2.0
  %v216 = vmul.f32 %v189, 2.0
  %v217 = vmul.f32 %v191, 2.0
  %v218 = vmul.f32 %v193, 2.0
  %v219 = vmul.f32 %v195, 2.0
  %v220 = vmul.f32 %v197, 2.0
  %v221 = vmul.f32 %v199, 2.0
  %v222 = vmul.f32 %v201, 2.0
  %v223 = vmul.f32 %v203, 2.0
  %v224 = vmul.f32 %v205, 2.0
  %v225 = vmul.f32 %v207, 2.0
  %v226 = vmul.f32 %v209, 2.0
  %v227 = vmul.f32 %v211, 2.0
  %v228 = vmul.f32 %v212, %v163
  %v229 = vmul.f32 %v213, %v163
  %v230 = vmul.f32 %v214, %v163
  %v231 = vmul.f32 %v215, %v163
  %v232 = vmul.f32 %v216, %v163
  %v233 = vmul.f32 %v217, %v163
  %v234 = vmul.f32 %v218, %v163
  %v235 = vmul.f32 %v219, %v163
  %v236 = vmul.f32 %v220, %v163
  %v237 = vmul.f32 %v221, %v163
  %v238 = vmul.f32 %v222, %v163
  %v239 = vmul.f32 %v223, %v163
  %v240 = vmul.f32 %v224, %v163
  %v241 = vmul.f32 %v225, %v163
  %v242 = vmul.f32 %v226, %v163
  %v243 = vmul.f32 %v227, %v163
  %v244 = vsub.f32 %v143, %v228
  %v245 = vsub.f32 %v144, %v229
  %v246 = vsub.f32 %v145, %v230
  %v247 = vsub.f32 %v146, %v231
  %v248 = vsub.f32 %v147, %v232
  %v249 = vsub.f32 %v148, %v233
  %v250 = vsub.f32 %v149, %v234
  %v251 = vsub.f32 %v150, %v235
  %v252 = vsub.f32 %v151, %v236
  %v253 = vsub.f32 %v152, %v237
  %v254 = vsub.f32 %v153, %v238
  %v255 = vsub.f32 %v154, %v239
  %v256 = vsub.f32 %v155, %v240
  %v257 = vsub.f32 %v156, %v241
  %v258 = vsub.f32 %v157, %v242
  %v259 = vsub.f32 %v158, %v243
  %v260 = vld [vmem:[%s3 + $0x1] sm:$0x1]
  %v261 = vlaneseq
  %v262 = vshrl.u32 %v261, 7
  %v263 = vsub.s32 0, %v262
  %v264 = vrot.slane %v260, %v263
  %v265 = vmul.f32 %v244, %v264
  %v266 = vmul.f32 %v245, %v264
  %v267 = vmul.f32 %v246, %v264
  %v268 = vmul.f32 %v247, %v264
  %v269 = vmul.f32 %v248, %v264
  %v270 = vmul.f32 %v249, %v264
  %v271 = vmul.f32 %v250, %v264
  %v272 = vmul.f32 %v251, %v264
  %v273 = vmul.f32 %v252, %v264
  %v274 = vmul.f32 %v253, %v264
  %v275 = vmul.f32 %v254, %v264
  %v276 = vmul.f32 %v255, %v264
  %v277 = vmul.f32 %v256, %v264
  %v278 = vmul.f32 %v257, %v264
  %v279 = vmul.f32 %v258, %v264
  %v280 = vmul.f32 %v259, %v264
  %281 = vadd.xlane.f32.xlu0 %v265
  %v282 = vpop.xlane.xlu0 %281
  %283 = vadd.xlane.f32.xlu0 %v266
  %v284 = vpop.xlane.xlu0 %283
  %285 = vadd.xlane.f32.xlu0 %v267
  %v286 = vpop.xlane.xlu0 %285
  %287 = vadd.xlane.f32.xlu0 %v268
  %v288 = vpop.xlane.xlu0 %287
  %289 = vadd.xlane.f32.xlu0 %v269
  %v290 = vpop.xlane.xlu0 %289
  %291 = vadd.xlane.f32.xlu0 %v270
  %v292 = vpop.xlane.xlu0 %291
  %293 = vadd.xlane.f32.xlu0 %v271
  %v294 = vpop.xlane.xlu0 %293
  %295 = vadd.xlane.f32.xlu0 %v272
  %v296 = vpop.xlane.xlu0 %295
  %297 = vadd.xlane.f32.xlu0 %v273
  %v298 = vpop.xlane.xlu0 %297
  %299 = vadd.xlane.f32.xlu0 %v274
  %v300 = vpop.xlane.xlu0 %299
  %301 = vadd.xlane.f32.xlu0 %v275
  %v302 = vpop.xlane.xlu0 %301
  %303 = vadd.xlane.f32.xlu0 %v276
  %v304 = vpop.xlane.xlu0 %303
  %305 = vadd.xlane.f32.xlu0 %v277
  %v306 = vpop.xlane.xlu0 %305
  %307 = vadd.xlane.f32.xlu0 %v278
  %v308 = vpop.xlane.xlu0 %307
  %309 = vadd.xlane.f32.xlu0 %v279
  %v310 = vpop.xlane.xlu0 %309
  %311 = vadd.xlane.f32.xlu0 %v280
  %v312 = vpop.xlane.xlu0 %311
  %v313 = vmul.f32 %v282, 2.0
  %v314 = vmul.f32 %v284, 2.0
  %v315 = vmul.f32 %v286, 2.0
  %v316 = vmul.f32 %v288, 2.0
  %v317 = vmul.f32 %v290, 2.0
  %v318 = vmul.f32 %v292, 2.0
  %v319 = vmul.f32 %v294, 2.0
  %v320 = vmul.f32 %v296, 2.0
  %v321 = vmul.f32 %v298, 2.0
  %v322 = vmul.f32 %v300, 2.0
  %v323 = vmul.f32 %v302, 2.0
  %v324 = vmul.f32 %v304, 2.0
  %v325 = vmul.f32 %v306, 2.0
  %v326 = vmul.f32 %v308, 2.0
  %v327 = vmul.f32 %v310, 2.0
  %v328 = vmul.f32 %v312, 2.0
  %v329 = vmul.f32 %v313, %v264
  %v330 = vmul.f32 %v314, %v264
  %v331 = vmul.f32 %v315, %v264
  %v332 = vmul.f32 %v316, %v264
  %v333 = vmul.f32 %v317, %v264
  %v334 = vmul.f32 %v318, %v264
  %v335 = vmul.f32 %v319, %v264
  %v336 = vmul.f32 %v320, %v264
  %v337 = vmul.f32 %v321, %v264
  %v338 = vmul.f32 %v322, %v264
  %v339 = vmul.f32 %v323, %v264
  %v340 = vmul.f32 %v324, %v264
  %v341 = vmul.f32 %v325, %v264
  %v342 = vmul.f32 %v326, %v264
  %v343 = vmul.f32 %v327, %v264
  %v344 = vmul.f32 %v328, %v264
  %v345 = vsub.f32 %v244, %v329
  %v346 = vsub.f32 %v245, %v330
  %v347 = vsub.f32 %v246, %v331
  %v348 = vsub.f32 %v247, %v332
  %v349 = vsub.f32 %v248, %v333
  %v350 = vsub.f32 %v249, %v334
  %v351 = vsub.f32 %v250, %v335
  %v352 = vsub.f32 %v251, %v336
  %v353 = vsub.f32 %v252, %v337
  %v354 = vsub.f32 %v253, %v338
  %v355 = vsub.f32 %v254, %v339
  %v356 = vsub.f32 %v255, %v340
  %v357 = vsub.f32 %v256, %v341
  %v358 = vsub.f32 %v257, %v342
  %v359 = vsub.f32 %v258, %v343
  %v360 = vsub.f32 %v259, %v344
  %361 = vst [vmem:[%s4] sm:$0xff] %v345
  %362 = vst [vmem:[%s4 + $0x8] sm:$0xff] %v346
  %363 = vst [vmem:[%s4 + $0x10] sm:$0xff] %v347
  %364 = vst [vmem:[%s4 + $0x18] sm:$0xff] %v348
  %365 = vst [vmem:[%s4 + $0x20] sm:$0xff] %v349
  %366 = vst [vmem:[%s4 + $0x28] sm:$0xff] %v350
  %367 = vst [vmem:[%s4 + $0x30] sm:$0xff] %v351
  %368 = vst [vmem:[%s4 + $0x38] sm:$0xff] %v352
  %369 = vst [vmem:[%s4 + $0x40] sm:$0xff] %v353
  %370 = vst [vmem:[%s4 + $0x48] sm:$0xff] %v354
  %371 = vst [vmem:[%s4 + $0x50] sm:$0xff] %v355
  %372 = vst [vmem:[%s4 + $0x58] sm:$0xff] %v356
  %373 = vst [vmem:[%s4 + $0x60] sm:$0xff] %v357
  %374 = vst [vmem:[%s4 + $0x68] sm:$0xff] %v358
  %375 = vst [vmem:[%s4 + $0x70] sm:$0xff] %v359
  %376 = vst [vmem:[%s4 + $0x78] sm:$0xff] %v360
  // Predicated region
  $region18: #{tied_linear_forward.3} parent=0 // pred_check
    _
  $region19: #{tied_linear_forward.3} parent=0 // pred_check_branch
    %378 = sbr.rel (0) target = $region21
  $region20: #{tied_linear_forward.3} parent=0 // pred_region
    _
  $region21: #{tied_linear_forward.3} parent=0 // pred_fallthru
    _
  // Predicated region
  $region22: #{tied_linear_forward.3} parent=0 // pred_check
    _
  $region23: #{tied_linear_forward.3} parent=0 // pred_check_branch
    %380 = sbr.rel (0) target = $region25
  $region24: #{tied_linear_forward.3} parent=0 // pred_region
    _
  $region25: #{tied_linear_forward.3} parent=0 // pred_fallthru
    _

// kernel: tied_linear_forward.5
$region0: #{tied_linear_forward.5}
  #allocation0 [shape = 'u32[]', space=smem, size = 0x4, offset = 0x4, fixed_abs, tag = 'smem constant byte address 0x4 - core index']
  #allocation1 [shape = 'u32[144,128]{1,0:T(1,128)}', space=vmem, size = 0x12000, scoped, tag = 'internal scratch']
  #allocation2 [shape = 'f32[16,256]{1,0:T(8,128)}', space=vmem, size = 0x4000, scoped, tag = 'scratch operand']
  %s0 = inlined_call_operand.vmem [shape: bf16[16,128], index: 0, kind: input, shape index: {}]
  %s1 = inlined_call_operand.vmem [shape: f32[256,128], index: 1, kind: input, shape index: {}]
  %s2 = inlined_call_operand.hbm [shape: f32[16,256], index: 2, kind: output, shape index: {}]
  %s3 = sld [smem:[#allocation0]]
  $region26: #{tied_linear_forward.5} parent=0
    _
  %s5 = ssub.s32 1, %s3
  %s6 = scalar_select 0, %s5, %s3
  $region1: #{tied_linear_forward.5} parent=0
    #allocation3 [shape = 'u8[16384]{0}', space=vmem, size = 0x4000, scoped, tag = 'output window, operand 0, single buffered']
    #allocation4 [shape = 's32[1]{0}', space=sflag, size = 0x4, scoped, tag = 'scoped memory for tied_linear_forward.5']
    %7 = vsyncpa [#allocation4], 0
    // Predicated region
    $region2: #{tied_linear_forward.5} parent=1 // pred_check
      _
    $region3: #{tied_linear_forward.5} parent=1 // pred_check_branch
      %9 = sbr.rel (0) target = $region5
    $region4: #{tied_linear_forward.5} parent=1 // pred_region
      _
    $region5: #{tied_linear_forward.5} parent=1 // pred_fallthru
      _
    // Predicated region
    $region6: #{tied_linear_forward.5} parent=1 // pred_check
      _
    $region7: #{tied_linear_forward.5} parent=1 // pred_check_branch
      %11 = sbr.rel (0) target = $region9
    $region8: #{tied_linear_forward.5} parent=1 // pred_region
      _
    $region9: #{tied_linear_forward.5} parent=1 // pred_fallthru
      _
    %p13 = scmp.eq.s32.totalorder 0, 0
    // Predicated region
    $region10: #{tied_linear_forward.5} parent=1 // pred_check
      %p14 = pneg %p13
    $region11: #{tied_linear_forward.5} parent=1 // pred_check_branch
      %16 = sbr.rel (%p14) target = $region13
    $region12: #{tied_linear_forward.5} parent=1 // pred_region
      %17 = vst [vmem:[#allocation2] sm:$0xff] 0.0
      %18 = vst [vmem:[#allocation2 + $0x8] sm:$0xff] 0.0
      %19 = vst [vmem:[#allocation2 + $0x10] sm:$0xff] 0.0
      %20 = vst [vmem:[#allocation2 + $0x18] sm:$0xff] 0.0
    $region13: #{tied_linear_forward.5} parent=1 // pred_fallthru
      _
    %v21 = vld [vmem:[%s0] sm:$0xf]
    %v22 = vld [vmem:[%s0 + $0x4] sm:$0xf]
    %v23 = vld [vmem:[%s1] sm:$0xff]
    %v24 = vld [vmem:[%s1 + $0x8] sm:$0xff]
    %v25 = vld [vmem:[%s1 + $0x10] sm:$0xff]
    %v26 = vld [vmem:[%s1 + $0x18] sm:$0xff]
    %v27 = vld [vmem:[%s1 + $0x20] sm:$0xff]
    %v28 = vld [vmem:[%s1 + $0x28] sm:$0xff]
    %v29 = vld [vmem:[%s1 + $0x30] sm:$0xff]
    %v30 = vld [vmem:[%s1 + $0x38] sm:$0xff]
    %v31 = vld [vmem:[%s1 + $0x40] sm:$0xff]
    %v32 = vld [vmem:[%s1 + $0x48] sm:$0xff]
    %v33 = vld [vmem:[%s1 + $0x50] sm:$0xff]
    %v34 = vld [vmem:[%s1 + $0x58] sm:$0xff]
    %v35 = vld [vmem:[%s1 + $0x60] sm:$0xff]
    %v36 = vld [vmem:[%s1 + $0x68] sm:$0xff]
    %v37 = vld [vmem:[%s1 + $0x70] sm:$0xff]
    %v38 = vld [vmem:[%s1 + $0x78] sm:$0xff]
    %v39 = vld [vmem:[%s1 + $0x80] sm:$0xff]
    %v40 = vld [vmem:[%s1 + $0x88] sm:$0xff]
    %v41 = vld [vmem:[%s1 + $0x90] sm:$0xff]
    %v42 = vld [vmem:[%s1 + $0x98] sm:$0xff]
    %v43 = vld [vmem:[%s1 + $0xa0] sm:$0xff]
    %v44 = vld [vmem:[%s1 + $0xa8] sm:$0xff]
    %v45 = vld [vmem:[%s1 + $0xb0] sm:$0xff]
    %v46 = vld [vmem:[%s1 + $0xb8] sm:$0xff]
    %v47 = vld [vmem:[%s1 + $0xc0] sm:$0xff]
    %v48 = vld [vmem:[%s1 + $0xc8] sm:$0xff]
    %v49 = vld [vmem:[%s1 + $0xd0] sm:$0xff]
    %v50 = vld [vmem:[%s1 + $0xd8] sm:$0xff]
    %v51 = vld [vmem:[%s1 + $0xe0] sm:$0xff]
    %v52 = vld [vmem:[%s1 + $0xe8] sm:$0xff]
    %v53 = vld [vmem:[%s1 + $0xf0] sm:$0xff]
    %v54 = vld [vmem:[%s1 + $0xf8] sm:$0xff]
    %v55 = vpack.c.bf16 %v24, %v23
    %v56 = vpack.c.bf16 %v26, %v25
    %v57 = vpack.c.bf16 %v28, %v27
    %v58 = vpack.c.bf16 %v30, %v29
    %v59 = vpack.c.bf16 %v32, %v31
    %v60 = vpack.c.bf16 %v34, %v33
    %v61 = vpack.c.bf16 %v36, %v35
    %v62 = vpack.c.bf16 %v38, %v37
    %v63 = vpack.c.bf16 %v40, %v39
    %v64 = vpack.c.bf16 %v42, %v41
    %v65 = vpack.c.bf16 %v44, %v43
    %v66 = vpack.c.bf16 %v46, %v45
    %v67 = vpack.c.bf16 %v48, %v47
    %v68 = vpack.c.bf16 %v50, %v49
    %v69 = vpack.c.bf16 %v52, %v51
    %v70 = vpack.c.bf16 %v54, %v53
    %v71 = vld [vmem:[#allocation2] sm:$0xff]
    %v72 = vld [vmem:[#allocation2 + $0x8] sm:$0xff]
    %v73 = vld [vmem:[#allocation2 + $0x10] sm:$0xff]
    %v74 = vld [vmem:[#allocation2 + $0x18] sm:$0xff]
    %v77 = vunpack.c.l.b16 %v21
    %v78 = vunpack.c.l.b16 %v22
    %v79 = vpack.c.b16 %v78, %v77
    %81 = vmatprep.subr.bf16.mxu0 0
    %82 = vmatpush1.bf16.xpose.msra.mxu0 %v55
    %83 = vmatprep.subr.bf16.mxu0 0
    %84 = vmatpush1.bf16.xpose.msra.mxu0 %v56
    %85 = vmatprep.subr.bf16.mxu0 0
    %86 = vmatpush1.bf16.xpose.msra.mxu0 %v57
    %87 = vmatprep.subr.bf16.mxu0 0
    %88 = vmatpush1.bf16.xpose.msra.mxu0 %v58
    %89 = vmatprep.subr.bf16.mxu0 0
    %90 = vmatpush1.bf16.xpose.msra.mxu0 %v59
    %91 = vmatprep.subr.bf16.mxu0 0
    %92 = vmatpush1.bf16.xpose.msra.mxu0 %v60
    %93 = vmatprep.subr.bf16.mxu0 0
    %94 = vmatpush1.bf16.xpose.msra.mxu0 %v61
    %95 = vmatprep.subr.bf16.mxu0 0
    %96 = vmatpush1.bf16.xpose.msra.mxu0 %v62
    %97 = vmatprep.subr.bf16.mxu0 0
    %98 = vmatpush1.bf16.xpose.msra.mxu0 %v63
    %99 = vmatprep.subr.bf16.mxu0 0
    %100 = vmatpush1.bf16.xpose.msra.mxu0 %v64
    %101 = vmatprep.subr.bf16.mxu0 0
    %102 = vmatpush1.bf16.xpose.msra.mxu0 %v65
    %103 = vmatprep.subr.bf16.mxu0 0
    %104 = vmatpush1.bf16.xpose.msra.mxu0 %v66
    %105 = vmatprep.subr.bf16.mxu0 0
    %106 = vmatpush1.bf16.xpose.msra.mxu0 %v67
    %107 = vmatprep.subr.bf16.mxu0 0
    %108 = vmatpush1.bf16.xpose.msra.mxu0 %v68
    %109 = vmatprep.subr.bf16.mxu0 0
    %110 = vmatpush1.bf16.xpose.msra.mxu0 %v69
    %111 = vmatprep.subr.bf16.mxu0 0
    %112 = vmatpush1.bf16.xpose.msra.mxu0 %v70
    %113 = vmatprep.mubr.bf16.mxu0 0
    %114 = vmatmul.mubr.bf16.gmra.mrb[0].mxu0 %v79
    %v115 = vpop.f32.mrb[0].mxu0
    %v116 = vadd.f32 0.0, %v115
    %v117 = vpop.f32.mrb[0].mxu0
    %v118 = vadd.f32 0.0, %v117
    %v119 = vpop.f32.mrb[0].mxu0
    %v120 = vadd.f32 0.0, %v119
    %v121 = vpop.f32.mrb[0].mxu0
    %v122 = vadd.f32 0.0, %v121
    %123 = vdwg.mxu0
    %v124 = vadd.f32 %v71, %v116
    %v125 = vadd.f32 %v72, %v118
    %v126 = vadd.f32 %v73, %v120
    %v127 = vadd.f32 %v74, %v122
    %128 = vst [vmem:[#allocation2] sm:$0xff] %v124
    %129 = vst [vmem:[#allocation2 + $0x8] sm:$0xff] %v125
    %130 = vst [vmem:[#allocation2 + $0x10] sm:$0xff] %v126
    %131 = vst [vmem:[#allocation2 + $0x18] sm:$0xff] %v127
    // Predicated region
    $region14: #{tied_linear_forward.5} parent=1 // pred_check
      %p132 = pneg %p13
    $region15: #{tied_linear_forward.5} parent=1 // pred_check_branch
      %134 = sbr.rel (%p132) target = $region17
    $region16: #{tied_linear_forward.5} parent=1 // pred_region
      %v135 = vld [vmem:[#allocation2] sm:$0xff]
      %v136 = vld [vmem:[#allocation2 + $0x8] sm:$0xff]
      %v137 = vld [vmem:[#allocation2 + $0x10] sm:$0xff]
      %v138 = vld [vmem:[#allocation2 + $0x18] sm:$0xff]
      %139 = vst [vmem:[#allocation3] sm:$0xff] %v135
      %140 = vst [vmem:[#allocation3 + $0x8] sm:$0xff] %v136
      %141 = vst [vmem:[#allocation3 + $0x10] sm:$0xff] %v137
      %142 = vst [vmem:[#allocation3 + $0x18] sm:$0xff] %v138
    $region17: #{tied_linear_forward.5} parent=1 // pred_fallthru
      _
    // Predicated region
    $region18: #{tied_linear_forward.5} parent=1 // pred_check
      _
    $region19: #{tied_linear_forward.5} parent=1 // pred_check_branch
      %144 = sbr.rel (0) target = $region21
    $region20: #{tied_linear_forward.5} parent=1 // pred_region
      %s146 = ssub.s32 512, 512
      %147 = vsyncadd [#allocation4], %s146
      %s148 = sshll.u32 [#allocation3], 4
      %s149 = int_to_ptr.vmem [resolvable:$true] %s148
      %154 = dma.vmem_to_hbm [thread:$0]  %s149, 512, %s2, [#allocation4], 256, 256, 16
    $region21: #{tied_linear_forward.5} parent=1 // pred_fallthru
      _
    // Predicated region
    $region22: #{tied_linear_forward.5} parent=1 // pred_check
      _
    $region23: #{tied_linear_forward.5} parent=1 // pred_check_branch
      %156 = sbr.rel (0) target = $region25
    $region24: #{tied_linear_forward.5} parent=1 // pred_region
      %157 = dma.done [#allocation4], 512
    $region25: #{tied_linear_forward.5} parent=1 // pred_fallthru
      _
    %158 = vsyncpa [#allocation4], 1

// kernel: tied_linear_forward.4
$region0: #{tied_linear_forward.4}
  #allocation0 [shape = 'u32[]', space=smem, size = 0x4, offset = 0x4, fixed_abs, tag = 'smem constant byte address 0x4 - core index']
  #allocation1 [shape = 'u32[144,128]{1,0:T(1,128)}', space=vmem, size = 0x12000, scoped, tag = 'internal scratch']
  #allocation2 [shape = 'f32[16,128]{1,0:T(8,128)}', space=vmem, size = 0x2000, scoped, tag = 'scratch operand']
  %s0 = inlined_call_operand.vmem [shape: f32[16,128], index: 0, kind: input, shape index: {}]
  %s1 = inlined_call_operand.vmem [shape: f32[128,128], index: 1, kind: input, shape index: {}]
  %s2 = inlined_call_operand.vmem [shape: bf16[16,128], index: 2, kind: output, shape index: {}]
  %s3 = sld [smem:[#allocation0]]
  $region26: #{tied_linear_forward.4} parent=0
    _
  %s5 = ssub.s32 1, %s3
  %s6 = scalar_select 0, %s5, %s3
  // Predicated region
  $region2: #{tied_linear_forward.4} parent=0 // pred_check
    _
  $region3: #{tied_linear_forward.4} parent=0 // pred_check_branch
    %8 = sbr.rel (0) target = $region5
  $region4: #{tied_linear_forward.4} parent=0 // pred_region
    _
  $region5: #{tied_linear_forward.4} parent=0 // pred_fallthru
    _
  // Predicated region
  $region6: #{tied_linear_forward.4} parent=0 // pred_check
    _
  $region7: #{tied_linear_forward.4} parent=0 // pred_check_branch
    %10 = sbr.rel (0) target = $region9
  $region8: #{tied_linear_forward.4} parent=0 // pred_region
    _
  $region9: #{tied_linear_forward.4} parent=0 // pred_fallthru
    _
  %p12 = scmp.eq.s32.totalorder 0, 0
  // Predicated region
  $region10: #{tied_linear_forward.4} parent=0 // pred_check
    %p13 = pneg %p12
  $region11: #{tied_linear_forward.4} parent=0 // pred_check_branch
    %15 = sbr.rel (%p13) target = $region13
  $region12: #{tied_linear_forward.4} parent=0 // pred_region
    %16 = vst [vmem:[#allocation2] sm:$0xff] 0.0
    %17 = vst [vmem:[#allocation2 + $0x8] sm:$0xff] 0.0
  $region13: #{tied_linear_forward.4} parent=0 // pred_fallthru
    _
  %v18 = vld [vmem:[%s0] sm:$0xff]
  %v19 = vld [vmem:[%s0 + $0x8] sm:$0xff]
  %v20 = vpack.c.bf16 %v19, %v18
  %v21 = vld [vmem:[%s1] sm:$0xff]
  %v22 = vld [vmem:[%s1 + $0x8] sm:$0xff]
  %v23 = vld [vmem:[%s1 + $0x10] sm:$0xff]
  %v24 = vld [vmem:[%s1 + $0x18] sm:$0xff]
  %v25 = vld [vmem:[%s1 + $0x20] sm:$0xff]
  %v26 = vld [vmem:[%s1 + $0x28] sm:$0xff]
  %v27 = vld [vmem:[%s1 + $0x30] sm:$0xff]
  %v28 = vld [vmem:[%s1 + $0x38] sm:$0xff]
  %v29 = vld [vmem:[%s1 + $0x40] sm:$0xff]
  %v30 = vld [vmem:[%s1 + $0x48] sm:$0xff]
  %v31 = vld [vmem:[%s1 + $0x50] sm:$0xff]
  %v32 = vld [vmem:[%s1 + $0x58] sm:$0xff]
  %v33 = vld [vmem:[%s1 + $0x60] sm:$0xff]
  %v34 = vld [vmem:[%s1 + $0x68] sm:$0xff]
  %v35 = vld [vmem:[%s1 + $0x70] sm:$0xff]
  %v36 = vld [vmem:[%s1 + $0x78] sm:$0xff]
  %v37 = vpack.c.bf16 %v22, %v21
  %v38 = vpack.c.bf16 %v24, %v23
  %v39 = vpack.c.bf16 %v26, %v25
  %v40 = vpack.c.bf16 %v28, %v27
  %v41 = vpack.c.bf16 %v30, %v29
  %v42 = vpack.c.bf16 %v32, %v31
  %v43 = vpack.c.bf16 %v34, %v33
  %v44 = vpack.c.bf16 %v36, %v35
  %v45 = vld [vmem:[#allocation2] sm:$0xff]
  %v46 = vld [vmem:[#allocation2 + $0x8] sm:$0xff]
  %47 = vmatprep.subr.bf16.mxu0 0
  %48 = vmatpush1.bf16.msra.mxu0 %v37
  %49 = vmatprep.subr.bf16.mxu0 0
  %50 = vmatpush1.bf16.msra.mxu0 %v38
  %51 = vmatprep.subr.bf16.mxu0 0
  %52 = vmatpush1.bf16.msra.mxu0 %v39
  %53 = vmatprep.subr.bf16.mxu0 0
  %54 = vmatpush1.bf16.msra.mxu0 %v40
  %55 = vmatprep.subr.bf16.mxu0 0
  %56 = vmatpush1.bf16.msra.mxu0 %v41
  %57 = vmatprep.subr.bf16.mxu0 0
  %58 = vmatpush1.bf16.msra.mxu0 %v42
  %59 = vmatprep.subr.bf16.mxu0 0
  %60 = vmatpush1.bf16.msra.mxu0 %v43
  %61 = vmatprep.subr.bf16.mxu0 0
  %62 = vmatpush1.bf16.msra.mxu0 %v44
  %63 = vmatprep.subr.bf16.mxu0 0
  %64 = vmatpush1.bf16.msra.mxu0 0
  %65 = vmatprep.subr.bf16.mxu0 0
  %66 = vmatpush1.bf16.msra.mxu0 0
  %67 = vmatprep.subr.bf16.mxu0 0
  %68 = vmatpush1.bf16.msra.mxu0 0
  %69 = vmatprep.subr.bf16.mxu0 0
  %70 = vmatpush1.bf16.msra.mxu0 0
  %71 = vmatprep.subr.bf16.mxu0 0
  %72 = vmatpush1.bf16.msra.mxu0 0
  %73 = vmatprep.subr.bf16.mxu0 0
  %74 = vmatpush1.bf16.msra.mxu0 0
  %75 = vmatprep.subr.bf16.mxu0 0
  %76 = vmatpush1.bf16.msra.mxu0 0
  %77 = vmatprep.subr.bf16.mxu0 0
  %78 = vmatpush1.bf16.msra.mxu0 0
  %79 = vmatprep.mubr.bf16.mxu0 0
  %80 = vmatmul.mubr.bf16.gmra.mrb[0].mxu0 %v20
  %v81 = vpop.f32.mrb[0].mxu0
  %v82 = vadd.f32 0.0, %v81
  %v83 = vpop.f32.mrb[0].mxu0
  %v84 = vpop.f32.mrb[0].mxu0
  %v85 = vadd.f32 0.0, %v84
  %v86 = vpop.f32.mrb[0].mxu0
  %87 = vdwg.mxu0
  %v88 = vadd.f32 %v45, %v82
  %v89 = vadd.f32 %v46, %v85
  %90 = vst [vmem:[#allocation2] sm:$0xff] %v88
  %91 = vst [vmem:[#allocation2 + $0x8] sm:$0xff] %v89
  // Predicated region
  $region14: #{tied_linear_forward.4} parent=0 // pred_check
    %p92 = pneg %p12
  $region15: #{tied_linear_forward.4} parent=0 // pred_check_branch
    %94 = sbr.rel (%p92) target = $region17
  $region16: #{tied_linear_forward.4} parent=0 // pred_region
    %v95 = vld [vmem:[#allocation2] sm:$0xff]
    %v96 = vld [vmem:[#allocation2 + $0x8] sm:$0xff]
    %v97 = vpack.c.bf16 %v96, %v95
    %v99 = vunpack.c.l.b16 %v97
    %v100 = vunpack.c.h.b16 %v97
    %v101 = vpack.c.b16 %v99, %v99
    %v102 = vpack.c.b16 %v100, %v100
    %105 = vst [vmem:[%s2] sm:$0xf] %v101
    %106 = vst [vmem:[%s2 + $0x4] sm:$0xf] %v102
  $region17: #{tied_linear_forward.4} parent=0 // pred_fallthru
    _
  // Predicated region
  $region18: #{tied_linear_forward.4} parent=0 // pred_check
    _
  $region19: #{tied_linear_forward.4} parent=0 // pred_check_branch
    %108 = sbr.rel (0) target = $region21
  $region20: #{tied_linear_forward.4} parent=0 // pred_region
    _
  $region21: #{tied_linear_forward.4} parent=0 // pred_fallthru
    _
  // Predicated region
  $region22: #{tied_linear_forward.4} parent=0 // pred_check
    _
  $region23: #{tied_linear_forward.4} parent=0 // pred_check_branch
    %110 = sbr.rel (0) target = $region25
  $region24: #{tied_linear_forward.4} parent=0 // pred_region
    _
  $region25: #{tied_linear_forward.4} parent=0 // pred_fallthru
    _

</llo_original>
